<compile_context>
chip_gen: v5e
topology: v5e:2x2
jax: 0.10.0
libtpu: 0.0.40
codegen_flags: <defaults>
</compile_context>

<pallas_src>
import functools

import jax
import jax.numpy as jnp
from jax.experimental import pallas as pl
from jax.experimental.pallas import tpu as pltpu


def _round_up(x, m):
    return (x + m - 1) // m * m


def _p2v_kernel(idx_ref, pin_ref, out_ref, acc_ref, *, count_col):
    # idx_ref: (1, TP) int32    pin_ref: (TP, FP) bf16/f32
    # out_ref: (TN, FP)         acc_ref: (TN, FP) f32 scratch
    k = pl.program_id(1)

    @pl.when(k == 0)
    def _init():
        acc_ref[...] = jnp.zeros_like(acc_ref)

    tn = acc_ref.shape[0]
    tp = idx_ref.shape[1]

    # One-hot selection tile: onehot[n, p] = 1 iff idx[p] == global node id n.
    # Built directly in the MXU input dtype (bf16 is exact for 0/1 values).
    node_ids = pl.program_id(0) * tn + jax.lax.broadcasted_iota(
        jnp.int32, (tn, tp), 0)
    onehot = (node_ids == idx_ref[...]).astype(pin_ref.dtype)        # (TN, TP)

    # Scatter-add on the MXU, accumulated in f32.  Column `count_col` of
    # pin_ref holds 1.0 for every real pin, so per-node counts come out of the
    # same matmul for free.
    acc_ref[...] += jnp.dot(onehot, pin_ref[...],
                            preferred_element_type=jnp.float32)

    @pl.when(k == pl.num_programs(1) - 1)
    def _finalize():
        sums = acc_ref[...]                                          # (TN, FP)
        counts = sums[:, count_col:count_col + 1]                    # (TN, 1)
        denom = jnp.where(counts > 0.0, counts, 1.0)
        inv = pl.reciprocal(denom, approx=True)                      # EUP slot
        out_ref[...] = (sums * inv).astype(out_ref.dtype)


def p2v_layer(pin_feat, edge_index, num_nodes=None, *,
              mxu_dtype=jnp.bfloat16, node_tile=256, pin_tile=2048):
    """Pallas equivalent of P2VLayer.forward(pin_feat, edge_index).

    num_nodes should be a static Python int (keeps the wrapper jittable).  If
    omitted, falls back to torch_scatter's dim_size = index.max() + 1, which
    forces a device->host sync and cannot run under jit.
    Pass mxu_dtype=jnp.float32 for bit-exact f32 accumulation of the inputs.
    """
    assert pin_feat.ndim == 2 and edge_index.ndim == 2
    n_pins, n_feat = pin_feat.shape

    if num_nodes is None:
        # TODO(synk): prefer passing num_nodes explicitly (this path syncs).
        num_nodes = int(jax.device_get(edge_index[0]).max()) + 1

    # ---- tile / padding plan -------------------------------------------------
    # Feature axis: pad to a multiple of 128 lanes, with >= 1 spare lane for the
    # folded "ones" (count) column.
    fp = _round_up(n_feat + 1, 128)

    # Node axis (output sublane axis).
    if _round_up(num_nodes, 8) >= node_tile:
        tn, n_pad = node_tile, _round_up(num_nodes, node_tile)
    else:
        tn = n_pad = _round_up(num_nodes, 8)

    # Pin axis (the reduction; also the lane axis of the index row -> 128-align).
    if _round_up(n_pins, 128) >= pin_tile:
        tp, p_pad = pin_tile, _round_up(n_pins, pin_tile)
    else:
        tp = p_pad = _round_up(n_pins, 128)

    # ---- pad / augment inputs ------------------------------------------------
    # Padded pins get index -1 so they never match any node id.
    idx_row = jnp.full((1, p_pad), -1, dtype=jnp.int32)
    idx_row = idx_row.at[0, :n_pins].set(edge_index[0].astype(jnp.int32))

    # Pin features in the MXU input dtype, lane-padded, with a ones column at
    # lane `n_feat` (per-node count rides along in the matmul).
    pin_aug = jnp.zeros((p_pad, fp), dtype=mxu_dtype)
    pin_aug = pin_aug.at[:n_pins, :n_feat].set(pin_feat.astype(mxu_dtype))
    pin_aug = pin_aug.at[:n_pins, n_feat].set(1.0)

    out_dtype = pin_feat.dtype
    grid = (n_pad // tn, p_pad // tp)

    # VMEM budget estimate (double-buffered inputs/outputs + accumulator) with
    # headroom, capped well below v7x's 64 MiB physical VMEM.
    in_itemsize = jnp.dtype(mxu_dtype).itemsize
    out_itemsize = jnp.dtype(out_dtype).itemsize
    vmem_est = (2 * (tp * fp * in_itemsize + tp * 4)
                + 2 * tn * fp * out_itemsize
                + tn * fp * 4)
    vmem_limit = int(min(48 * 1024 * 1024,
                         max(2 * vmem_est, 8 * 1024 * 1024)))

    out_padded = pl.pallas_call(
        functools.partial(_p2v_kernel, count_col=n_feat),
        out_shape=jax.ShapeDtypeStruct((n_pad, fp), out_dtype),
        grid_spec=pltpu.PrefetchScalarGridSpec(
            num_scalar_prefetch=0,
            grid=grid,
            in_specs=[
                pl.BlockSpec((1, tp), lambda i, k: (0, k)),
                pl.BlockSpec((tp, fp), lambda i, k: (k, 0)),
            ],
            out_specs=pl.BlockSpec((tn, fp), lambda i, k: (i, 0)),
            scratch_shapes=[pltpu.VMEM((tn, fp), jnp.float32)],
        ),
        compiler_params=pltpu.CompilerParams(
            dimension_semantics=("parallel", "arbitrary"),
            vmem_limit_bytes=vmem_limit),
    )(idx_row, pin_aug)

    return out_padded[:num_nodes, :n_feat]


def _reference_scatter_mean(pin_feat, index, n_nodes):
    sums = jax.ops.segment_sum(pin_feat, index, num_segments=n_nodes)
    cnts = jax.ops.segment_sum(jnp.ones((pin_feat.shape[0],), pin_feat.dtype),
                               index, num_segments=n_nodes)
    return sums / jnp.maximum(cnts, 1.0)[:, None]


if __name__ == "__main__":
    key = jax.random.PRNGKey(0)
    k_feat, k_src, k_dst = jax.random.split(key, 3)

    n_pins, n_feat, n_nodes = 16, 32, 8
    pin_feat = jax.random.normal(k_feat, (n_pins, n_feat), dtype=jnp.float32)
    src = jax.random.randint(k_src, (n_pins,), 0, n_nodes, dtype=jnp.int32)
    src = src.at[0].set(n_nodes - 1)          # make sure the max id is present
    dst = jax.random.randint(k_dst, (n_pins,), 0, n_nodes, dtype=jnp.int32)
    edge_index = jnp.stack([src, dst], axis=0)            # [2, P]

    fn = jax.jit(p2v_layer, static_argnums=(2,))
    out = jax.block_until_ready(fn(pin_feat, edge_index, n_nodes))

    # Reference uses the same bf16 rounding of the pin features as the MXU path
    # (accumulation stays f32 in both); tolerance covers the EUP approx
    # reciprocal used in the finalize step.
    ref = _reference_scatter_mean(
        pin_feat.astype(jnp.bfloat16).astype(jnp.float32), src, n_nodes)

    assert out.shape == (n_nodes, n_feat)
    assert jnp.allclose(out, ref, atol=1e-2, rtol=1e-2), "mismatch vs reference"

    print("KERNEL_OK")
</pallas_src>

<mosaic_0001>
module attributes {stable_mosaic.version = 11 : i64} {
  func.func @_p2v_kernel(%arg0: i32, %arg1: i32, %arg2: memref<1x128xi32, #tpu.memory_space<vmem>>, %arg3: memref<128x128xbf16, #tpu.memory_space<vmem>>, %arg4: memref<8x128xf32, #tpu.memory_space<vmem>>, %arg5: memref<8x128xf32, #tpu.memory_space<vmem>>) attributes {dimension_semantics = [#tpu.dimension_semantics<parallel>, #tpu.dimension_semantics<arbitrary>], iteration_bounds = array<i64: 1, 1>, scalar_prefetch = 0 : i64, scratch_operands = 1 : i64, tpu.core_type = #tpu.core_type<tc>, window_params = [{transform_indices = @transform_0, window_bounds = array<i64: 1, 128>}, {transform_indices = @transform_1, window_bounds = array<i64: 128, 128>}, {transform_indices = @transform_2, window_bounds = array<i64: 8, 128>}]} {
    %c0_i32 = arith.constant 0 : i32
    %0 = arith.cmpi eq, %arg1, %c0_i32 : i32
    %1 = arith.extui %0 : i1 to i32
    %c0_i32_0 = arith.constant 0 : i32
    %2 = arith.cmpi ne, %1, %c0_i32_0 : i32
    scf.if %2 {
      %cst_10 = arith.constant 0.000000e+00 : f32
      %21 = vector.broadcast %cst_10 : f32 to vector<8x128xf32>
      %c0_11 = arith.constant 0 : index
      %c0_12 = arith.constant 0 : index
      %22 = vector.load %arg5[%c0_11, %c0_12] : memref<8x128xf32, #tpu.memory_space<vmem>>, vector<8x128xf32>
      tpu.vector_store %arg5[%c0_11, %c0_12], %21 {strides = array<i32>} : memref<8x128xf32, #tpu.memory_space<vmem>>, vector<8x128xf32>,
    } else {
    }
    %c8_i32 = arith.constant 8 : i32
    %3 = arith.muli %arg0, %c8_i32 : i32
    %4 = tpu.iota {dimensions = array<i32: 0>} : vector<8x128xi32>
    %5 = vector.broadcast %3 : i32 to vector<8x128xi32>
    %6 = arith.addi %5, %4 : vector<8x128xi32>
    %c0 = arith.constant 0 : index
    %c0_1 = arith.constant 0 : index
    %7 = vector.load %arg2[%c0, %c0_1] : memref<1x128xi32, #tpu.memory_space<vmem>>, vector<1x128xi32>
    %8 = vector.broadcast %7 : vector<1x128xi32> to vector<8x128xi32>
    %9 = arith.cmpi eq, %6, %8 : vector<8x128xi32>
    %10 = arith.extui %9 : vector<8x128xi1> to vector<8x128xi32>
    %11 = arith.sitofp %10 : vector<8x128xi32> to vector<8x128xf32>
    %12 = arith.truncf %11 : vector<8x128xf32> to vector<8x128xbf16>
    %c0_2 = arith.constant 0 : index
    %c0_3 = arith.constant 0 : index
    %13 = vector.load %arg5[%c0_2, %c0_3] : memref<8x128xf32, #tpu.memory_space<vmem>>, vector<8x128xf32>
    %c0_4 = arith.constant 0 : index
    %c0_5 = arith.constant 0 : index
    %14 = vector.load %arg3[%c0_4, %c0_5] : memref<128x128xbf16, #tpu.memory_space<vmem>>, vector<128x128xbf16>
    %cst = arith.constant dense<0.000000e+00> : vector<8x128xf32>
    %15 = tpu.matmul %12, %14, %cst {dimension_numbers = #tpu.dot_dimension_numbers<[1], [0], [0], [1], [0, 0, 1, 1], [], []>} : vector<8x128xbf16>, vector<128x128xbf16>, vector<8x128xf32> -> vector<8x128xf32>
    %16 = arith.addf %13, %15 : vector<8x128xf32>
    %c0_6 = arith.constant 0 : index
    %c0_7 = arith.constant 0 : index
    %17 = vector.load %arg5[%c0_6, %c0_7] : memref<8x128xf32, #tpu.memory_space<vmem>>, vector<8x128xf32>
    tpu.vector_store %arg5[%c0_6, %c0_7], %16 {strides = array<i32>} : memref<8x128xf32, #tpu.memory_space<vmem>>, vector<8x128xf32>,
    %c0_i32_8 = arith.constant 0 : i32
    %18 = arith.cmpi eq, %arg1, %c0_i32_8 : i32
    %19 = arith.extui %18 : i1 to i32
    %c0_i32_9 = arith.constant 0 : i32
    %20 = arith.cmpi ne, %19, %c0_i32_9 : i32
    scf.if %20 {
      %c0_10 = arith.constant 0 : index
      %c0_11 = arith.constant 0 : index
      %21 = vector.load %arg5[%c0_10, %c0_11] : memref<8x128xf32, #tpu.memory_space<vmem>>, vector<8x128xf32>
      %22 = vector.extract_strided_slice %21 {offsets = [0, 32], sizes = [8, 1], strides = [1, 1]} : vector<8x128xf32> to vector<8x1xf32>
      %cst_12 = arith.constant 0.000000e+00 : f32
      %23 = vector.broadcast %cst_12 : f32 to vector<8x1xf32>
      %24 = arith.cmpf ogt, %22, %23 : vector<8x1xf32>
      %cst_13 = arith.constant 1.000000e+00 : f32
      %25 = vector.broadcast %cst_13 : f32 to vector<8x1xf32>
      %26 = arith.select %24, %22, %25 : vector<8x1xi1>, vector<8x1xf32>
      %27 = tpu.reciprocal %26 {approx = true} : vector<8x1xf32> -> vector<8x1xf32>
      %28 = vector.broadcast %27 : vector<8x1xf32> to vector<8x128xf32>
      %29 = arith.mulf %21, %28 : vector<8x128xf32>
      %c0_14 = arith.constant 0 : index
      %c0_15 = arith.constant 0 : index
      %30 = vector.load %arg4[%c0_14, %c0_15] : memref<8x128xf32, #tpu.memory_space<vmem>>, vector<8x128xf32>
      tpu.vector_store %arg4[%c0_14, %c0_15], %29 {strides = array<i32>} : memref<8x128xf32, #tpu.memory_space<vmem>>, vector<8x128xf32>,
    } else {
    }
    return
  }
  func.func @transform_0(%arg0: i32, %arg1: i32) -> (i32, i32) {
    %c0_i32 = arith.constant 0 : i32
    %c0_i32_0 = arith.constant 0 : i32
    return %c0_i32, %arg1 : i32, i32
  }
  func.func @transform_1(%arg0: i32, %arg1: i32) -> (i32, i32) {
    %c0_i32 = arith.constant 0 : i32
    %c0_i32_0 = arith.constant 0 : i32
    return %arg1, %c0_i32 : i32, i32
  }
  func.func @transform_2(%arg0: i32, %arg1: i32) -> (i32, i32) {
    %c0_i32 = arith.constant 0 : i32
    %c0_i32_0 = arith.constant 0 : i32
    return %arg0, %c0_i32 : i32, i32
  }
}

</mosaic_0001>

<llo_original>
// kernel: p2v_layer.1
$region0: #{p2v_layer.1}
  #allocation0 [shape = 'u32[]', space=smem, size = 0x4, offset = 0x4, fixed_abs, tag = 'smem constant byte address 0x4 - core index']
  #allocation1 [shape = 'u32[72,128]{1,0:T(1,128)}', space=vmem, size = 0x9000, scoped, tag = 'internal scratch']
  #allocation2 [shape = 'f32[8,128]{1,0:T(8,128)}', space=vmem, size = 0x1000, scoped, tag = 'scratch operand']
  %s0 = inlined_call_operand.vmem [shape: s32[1,128], index: 0, kind: input, shape index: {}]
  %s1 = inlined_call_operand.vmem [shape: bf16[128,128], index: 1, kind: input, shape index: {}]
  %s2 = inlined_call_operand.hbm [shape: f32[8,128], index: 2, kind: output, shape index: {}]
  %s3 = sld [smem:[#allocation0]]
  $region26: #{p2v_layer.1} parent=0
    _
  %s5 = ssub.s32 1, %s3
  %s6 = scalar_select 0, %s5, %s3
  $region1: #{p2v_layer.1} parent=0
    #allocation3 [shape = 'u8[4096]{0}', space=vmem, size = 0x1000, scoped, tag = 'output window, operand 0, single buffered']
    #allocation4 [shape = 's32[1]{0}', space=sflag, size = 0x4, scoped, tag = 'scoped memory for p2v_layer.1']
    %7 = vsyncpa [#allocation4], 0
    // Predicated region
    $region2: #{p2v_layer.1} parent=1 // pred_check
      _
    $region3: #{p2v_layer.1} parent=1 // pred_check_branch
      %9 = sbr.rel (0) target = $region5
    $region4: #{p2v_layer.1} parent=1 // pred_region
      _
    $region5: #{p2v_layer.1} parent=1 // pred_fallthru
      _
    // Predicated region
    $region6: #{p2v_layer.1} parent=1 // pred_check
      _
    $region7: #{p2v_layer.1} parent=1 // pred_check_branch
      %11 = sbr.rel (0) target = $region9
    $region8: #{p2v_layer.1} parent=1 // pred_region
      _
    $region9: #{p2v_layer.1} parent=1 // pred_fallthru
      _
    %p12 = scmp.eq.s32.totalorder 0, 0
    // Predicated region
    $region10: #{p2v_layer.1} parent=1 // pred_check
      %p13 = pneg %p12
    $region11: #{p2v_layer.1} parent=1 // pred_check_branch
      %15 = sbr.rel (%p13) target = $region13
    $region12: #{p2v_layer.1} parent=1 // pred_region
      %16 = vst [vmem:[#allocation2] sm:$0xff] 0.0
    $region13: #{p2v_layer.1} parent=1 // pred_fallthru
      _
    %s17 = smul.u32 0, 8
    %v18 = vlaneseq
    %v19 = vshrl.u32 %v18, 7
    %v20 = vstv %s17
    %v21 = vadd.s32 %v20, %v19
    %v22 = vld [vmem:[%s0] sm:$0x1]
    %v23 = vperm.slane %v22, 0
    %vm24 = vcmp.eq.s32.totalorder %v21, %v23
    %v25 = vsel %vm24, 1, 0
    %v26 = vcvt.s32.f32 %v25
    %v27 = vpack.c.bf16 %v26, %v26
    %v28 = vld [vmem:[#allocation2] sm:$0xff]
    %v29 = vld [vmem:[%s1] sm:$0xf]
    %v30 = vld [vmem:[%s1 + $0x4] sm:$0xf]
    %v31 = vld [vmem:[%s1 + $0x8] sm:$0xf]
    %v32 = vld [vmem:[%s1 + $0xc] sm:$0xf]
    %v33 = vld [vmem:[%s1 + $0x10] sm:$0xf]
    %v34 = vld [vmem:[%s1 + $0x14] sm:$0xf]
    %v35 = vld [vmem:[%s1 + $0x18] sm:$0xf]
    %v36 = vld [vmem:[%s1 + $0x1c] sm:$0xf]
    %v37 = vld [vmem:[%s1 + $0x20] sm:$0xf]
    %v38 = vld [vmem:[%s1 + $0x24] sm:$0xf]
    %v39 = vld [vmem:[%s1 + $0x28] sm:$0xf]
    %v40 = vld [vmem:[%s1 + $0x2c] sm:$0xf]
    %v41 = vld [vmem:[%s1 + $0x30] sm:$0xf]
    %v42 = vld [vmem:[%s1 + $0x34] sm:$0xf]
    %v43 = vld [vmem:[%s1 + $0x38] sm:$0xf]
    %v44 = vld [vmem:[%s1 + $0x3c] sm:$0xf]
    %v61 = vunpack.c.l.b16 %v29
    %v62 = vunpack.c.l.b16 %v30
    %v63 = vunpack.c.l.b16 %v31
    %v64 = vunpack.c.l.b16 %v32
    %v65 = vunpack.c.l.b16 %v33
    %v66 = vunpack.c.l.b16 %v34
    %v67 = vunpack.c.l.b16 %v35
    %v68 = vunpack.c.l.b16 %v36
    %v69 = vunpack.c.l.b16 %v37
    %v70 = vunpack.c.l.b16 %v38
    %v71 = vunpack.c.l.b16 %v39
    %v72 = vunpack.c.l.b16 %v40
    %v73 = vunpack.c.l.b16 %v41
    %v74 = vunpack.c.l.b16 %v42
    %v75 = vunpack.c.l.b16 %v43
    %v76 = vunpack.c.l.b16 %v44
    %v77 = vpack.c.b16 %v62, %v61
    %v78 = vpack.c.b16 %v64, %v63
    %v79 = vpack.c.b16 %v66, %v65
    %v80 = vpack.c.b16 %v68, %v67
    %v81 = vpack.c.b16 %v70, %v69
    %v82 = vpack.c.b16 %v72, %v71
    %v83 = vpack.c.b16 %v74, %v73
    %v84 = vpack.c.b16 %v76, %v75
    %93 = vmatpush.bf16.msra.mxu0 %v84
    %94 = vmatpush.bf16.msra.mxu0 %v83
    %95 = vmatpush.bf16.msra.mxu0 %v82
    %96 = vmatpush.bf16.msra.mxu0 %v81
    %97 = vmatpush.bf16.msra.mxu0 %v80
    %98 = vmatpush.bf16.msra.mxu0 %v79
    %99 = vmatpush.bf16.msra.mxu0 %v78
    %100 = vmatpush.bf16.msra.mxu0 %v77
    %101 = vmatmul.bf16.gmra.mxu0 %v27
    %v102 = vpop.f32.mrf.mxu0
    %v103 = vadd.f32 0.0, %v102
    %v104 = vpop.f32.mrf.mxu0
    %105 = vdwg.mxu0
    %v106 = vadd.f32 %v28, %v103
    %107 = vst [vmem:[#allocation2] sm:$0xff] %v106
    // Predicated region
    $region14: #{p2v_layer.1} parent=1 // pred_check
      %p108 = pneg %p12
    $region15: #{p2v_layer.1} parent=1 // pred_check_branch
      %110 = sbr.rel (%p108) target = $region17
    $region16: #{p2v_layer.1} parent=1 // pred_region
      %v111 = vld [vmem:[#allocation2] sm:$0xff]
      %vm112 = vcmp.gt.f32.partialorder %v111, 0.0
      %v113 = vsel %vm112, %v111, 1.0
      %v114 = vrcp.pop %v113
      %116 = vset.pattern.permute.xlu0 32
      %117 = vperm.xlu0 %116, %v114
      %v118 = vpop.permute.xlu0 %117
      %v120 = vmul.f32 %v111, %v118
      %121 = vst [vmem:[#allocation3] sm:$0xff] %v120
    $region17: #{p2v_layer.1} parent=1 // pred_fallthru
      _
    // Predicated region
    $region18: #{p2v_layer.1} parent=1 // pred_check
      _
    $region19: #{p2v_layer.1} parent=1 // pred_check_branch
      %123 = sbr.rel (0) target = $region21
    $region20: #{p2v_layer.1} parent=1 // pred_region
      %125 = vsyncadd [#allocation4], 0
      %s127 = sshll.u32 [#allocation3], 4
      %s128 = int_to_ptr.vmem [resolvable:$true] %s127
      %s129 = sshll.u32 %s2, 4
      %s130 = int_to_ptr.hbm [resolvable:$true] %s129
      %132 = dma.vmem_to_hbm [thread:$0]  %s128, 128, %s130, [#allocation4]
    $region21: #{p2v_layer.1} parent=1 // pred_fallthru
      _
    // Predicated region
    $region22: #{p2v_layer.1} parent=1 // pred_check
      _
    $region23: #{p2v_layer.1} parent=1 // pred_check_branch
      %134 = sbr.rel (0) target = $region25
    $region24: #{p2v_layer.1} parent=1 // pred_region
      %136 = dma.done [#allocation4], 128
    $region25: #{p2v_layer.1} parent=1 // pred_fallthru
      _
    %137 = vsyncpa [#allocation4], 1

</llo_original>
